<compile_context>
chip_gen: v5e
topology: v5e:2x2
jax: 0.10.0
libtpu: 0.0.40
codegen_flags: <defaults>
</compile_context>

<pallas_src>
import functools

import jax
import jax.numpy as jnp
from jax import lax
from jax.experimental import pallas as pl
from jax.experimental.pallas import tpu as pltpu

GAMMA = 2.0
ALPHA = 0.25
_LANES = 128


def _cdiv(a, b):
    return -(-a // b)


def _round_up(a, b):
    return _cdiv(a, b) * b


def _default_num_parallel():
    # v7x has 2 TensorCores per chip; earlier generations have 1.
    try:
        kind = jax.devices()[0].device_kind.lower()
    except Exception:  # pragma: no cover - defensive
        return 1
    return 2 if ("v7" in kind or "7x" in kind) else 1


def _qfocal_elementwise(pred, true, gamma, alpha):
    """Plain-JAX per-element QFocalLoss (used for the ragged tail and reference)."""
    x = pred.astype(jnp.float32)
    y = true.astype(jnp.float32)
    bce = jnp.maximum(x, 0.0) - x * y + jnp.log1p(jnp.exp(-jnp.abs(x)))
    p = jax.nn.sigmoid(x)
    alpha_factor = y * alpha + (1.0 - y) * (1.0 - alpha)
    mod = jnp.abs(y - p) ** gamma
    return bce * alpha_factor * mod


def _qfocal_kernel(pred_ref, true_ref, out_ref, acc_ref, *,
                   gamma, alpha, rows, tile_rows, steps, mask_needed):
    i = pl.program_id(0)   # parallel chunk (megacore-shardable)
    j = pl.program_id(1)   # sequential reduction step within the chunk

    @pl.when(j == 0)
    def _():
        acc_ref[...] = jnp.zeros_like(acc_ref)

    x = pred_ref[...].astype(jnp.float32)
    y = true_ref[...].astype(jnp.float32)

    # Single shared transcendental: e = exp(-|x|).
    e = jnp.exp(-jnp.abs(x))

    # BCEWithLogitsLoss(reduction='none'), numerically stable:
    #   max(x, 0) - x*y + log1p(exp(-|x|))
    bce = jnp.maximum(x, 0.0) - x * y + jnp.log1p(e)

    # sigmoid(x) from the same exp.  EUP approx reciprocal + one Newton step
    # (instead of the multi-op VPU f32 divide).
    denom = 1.0 + e
    recip = pl.reciprocal(denom, approx=True)
    recip = recip * (2.0 - denom * recip)          # Newton: back to ~f32 accuracy
    pred_prob = jnp.where(x >= 0.0, recip, e * recip)

    # y*alpha + (1-y)*(1-alpha) folded to 2 VPU ops.
    alpha_factor = (1.0 - alpha) + y * (2.0 * alpha - 1.0)

    d = y - pred_prob
    if gamma == 2.0:
        mod = d * d                                # no float pow / extra EUP work
    else:
        mod = jnp.abs(d) ** gamma                  # generic fallback

    loss = bce * alpha_factor * mod

    def _accumulate(v):
        # (tile_rows,128) -> (tile_rows//8, 8, 128), sum over the vreg-stack
        # axis = pure VPU adds, no cross-lane reduce.
        acc_ref[...] += v.reshape(tile_rows // 8, 8, _LANES).sum(axis=0)

    if mask_needed:
        block = i * steps + j
        last_real = (rows - 1) // tile_rows        # last in-bounds block (static)
        is_edge = block >= last_real

        @pl.when(jnp.logical_not(is_edge))
        def _():
            _accumulate(loss)

        @pl.when(is_edge)
        def _():
            # Only the final (partial) block and any overflow duplicates pay
            # for the iota/compare/select.
            row = lax.broadcasted_iota(jnp.int32, loss.shape, 0)
            valid_rows = rows - block * tile_rows  # <= 0 for overflow blocks
            _accumulate(jnp.where(row < valid_rows, loss, 0.0))
    else:
        _accumulate(loss)

    @pl.when(j == pl.num_programs(1) - 1)
    def _():
        out_ref[...] = acc_ref[...]


def qfocal_loss(pred, true, *, gamma=GAMMA, alpha=ALPHA,
                tile_rows=2048, num_parallel=None, low_precision=False):
    """QFocalLoss(BCEWithLogitsLoss(reduction='mean'), gamma, alpha)."""
    assert pred.shape == true.shape
    total = int(pred.size)

    pred_flat = jnp.ravel(pred)
    true_flat = jnp.ravel(true)
    if low_precision:
        # Optional bandwidth saver (v5e/v6e); kernel math stays f32.
        pred_flat = pred_flat.astype(jnp.bfloat16)
        true_flat = true_flat.astype(jnp.bfloat16)

    rows = total // _LANES            # number of full 128-lane rows
    rem = total - rows * _LANES       # ragged tail (< 128 elements)

    # Tiny ragged tail handled with plain XLA and added to the partial sums.
    tail_sum = jnp.float32(0.0)
    if rem:
        tail_sum = _qfocal_elementwise(
            pred_flat[rows * _LANES:], true_flat[rows * _LANES:],
            float(gamma), float(alpha)).sum()

    if rows == 0:
        return tail_sum / jnp.float32(total)

    main = rows * _LANES
    pred2d = (pred_flat if rem == 0 else pred_flat[:main]).reshape(rows, _LANES)
    true2d = (true_flat if rem == 0 else true_flat[:main]).reshape(rows, _LANES)

    # Tile rows: multiple of 8 (sublane), no larger than the row count (rounded).
    tr = min(_round_up(max(tile_rows, 8), 8), _round_up(rows, 8))
    n_tiles = _cdiv(rows, tr)
    n_par_req = _default_num_parallel() if num_parallel is None else num_parallel
    n_par = max(1, min(n_par_req, n_tiles))
    steps = _cdiv(n_tiles, n_par)
    # Masking is only compiled in when the grid over-covers the row axis
    # (partial last block and/or duplicate overflow blocks).
    mask_needed = (n_par * steps * tr) != rows

    kernel = functools.partial(
        _qfocal_kernel,
        gamma=float(gamma), alpha=float(alpha),
        rows=rows, tile_rows=tr, steps=steps, mask_needed=mask_needed)

    last_block = n_tiles - 1
    if mask_needed:
        # Clamp so overflow grid steps re-read the last real block (they are
        # fully masked in-kernel); partial edge blocks are handled by Pallas.
        in_map = lambda i, j: (jnp.minimum(i * steps + j, last_block), 0)
    else:
        in_map = lambda i, j: (i * steps + j, 0)

    partials = pl.pallas_call(
        kernel,
        out_shape=jax.ShapeDtypeStruct((n_par * 8, _LANES), jnp.float32),
        grid_spec=pltpu.PrefetchScalarGridSpec(
            num_scalar_prefetch=0,
            grid=(n_par, steps),
            in_specs=[
                pl.BlockSpec((tr, _LANES), in_map),
                pl.BlockSpec((tr, _LANES), in_map),
            ],
            out_specs=pl.BlockSpec((8, _LANES), lambda i, j: (i, 0)),
            scratch_shapes=[pltpu.VMEM((8, _LANES), jnp.float32)],
        ),
        compiler_params=pltpu.CompilerParams(
            dimension_semantics=("parallel", "arbitrary"),
        ),
    )(pred2d, true2d)

    # Single final cross-lane reduce + mean on a tiny (n_par*8, 128) array.
    return (jnp.sum(partials) + tail_sum) / jnp.float32(total)


def _qfocal_ref(pred, true, gamma=GAMMA, alpha=ALPHA):
    return jnp.mean(_qfocal_elementwise(pred, true, gamma, alpha))


if __name__ == "__main__":
    key = jax.random.PRNGKey(0)
    k1, k2, k3, k4 = jax.random.split(key, 4)

    # Shapes consistent with a YOLOv5 classification-branch logit tensor (NCHW).
    pred = jax.random.normal(k1, (2, 4, 16, 16), dtype=jnp.float32)
    # Quality / IoU-aware soft targets in [0, 1].
    true = jax.random.uniform(k2, (2, 4, 16, 16), dtype=jnp.float32)

    out = jax.block_until_ready(qfocal_loss(pred, true))
    ref = _qfocal_ref(pred, true)
    assert jnp.allclose(out, ref, rtol=1e-4, atol=1e-6), (out, ref)

    # Ragged shape: exercises the masked edge-block path and the XLA tail.
    pred_r = jax.random.normal(k3, (3, 5, 7, 11), dtype=jnp.float32)
    true_r = jax.random.uniform(k4, (3, 5, 7, 11), dtype=jnp.float32)
    out_r = jax.block_until_ready(qfocal_loss(pred_r, true_r))
    ref_r = _qfocal_ref(pred_r, true_r)
    assert jnp.allclose(out_r, ref_r, rtol=1e-4, atol=1e-6), (out_r, ref_r)

    print("KERNEL_OK")
</pallas_src>

<mosaic_0001>
module attributes {stable_mosaic.version = 11 : i64} {
  func.func @_qfocal_kernel(%arg0: i32, %arg1: i32, %arg2: memref<16x128xf32, #tpu.memory_space<vmem>>, %arg3: memref<16x128xf32, #tpu.memory_space<vmem>>, %arg4: memref<8x128xf32, #tpu.memory_space<vmem>>, %arg5: memref<8x128xf32, #tpu.memory_space<vmem>>) attributes {dimension_semantics = [#tpu.dimension_semantics<parallel>, #tpu.dimension_semantics<arbitrary>], iteration_bounds = array<i64: 1, 1>, scalar_prefetch = 0 : i64, scratch_operands = 1 : i64, tpu.core_type = #tpu.core_type<tc>, window_params = [{transform_indices = @transform_0, window_bounds = array<i64: 16, 128>}, {transform_indices = @transform_1, window_bounds = array<i64: 16, 128>}, {transform_indices = @transform_2, window_bounds = array<i64: 8, 128>}]} {
    %c0_i32 = arith.constant 0 : i32
    %0 = arith.cmpi eq, %arg1, %c0_i32 : i32
    %1 = arith.extui %0 : i1 to i32
    %c0_i32_0 = arith.constant 0 : i32
    %2 = arith.cmpi ne, %1, %c0_i32_0 : i32
    scf.if %2 {
      %cst_17 = arith.constant 0.000000e+00 : f32
      %42 = vector.broadcast %cst_17 : f32 to vector<8x128xf32>
      %c0_18 = arith.constant 0 : index
      %c0_19 = arith.constant 0 : index
      %43 = vector.load %arg5[%c0_18, %c0_19] : memref<8x128xf32, #tpu.memory_space<vmem>>, vector<8x128xf32>
      tpu.vector_store %arg5[%c0_18, %c0_19], %42 {strides = array<i32>} : memref<8x128xf32, #tpu.memory_space<vmem>>, vector<8x128xf32>,
    } else {
    }
    %c0 = arith.constant 0 : index
    %c0_1 = arith.constant 0 : index
    %3 = vector.load %arg2[%c0, %c0_1] : memref<16x128xf32, #tpu.memory_space<vmem>>, vector<16x128xf32>
    %c0_2 = arith.constant 0 : index
    %c0_3 = arith.constant 0 : index
    %4 = vector.load %arg3[%c0_2, %c0_3] : memref<16x128xf32, #tpu.memory_space<vmem>>, vector<16x128xf32>
    %5 = math.absf %3 : vector<16x128xf32>
    %cst = arith.constant 0.000000e+00 : f32
    %6 = vector.broadcast %cst : f32 to vector<16x128xf32>
    %7 = arith.subf %6, %5 : vector<16x128xf32>
    %8 = math.exp %7 : vector<16x128xf32>
    %cst_4 = arith.constant 0.000000e+00 : f32
    %9 = vector.broadcast %cst_4 : f32 to vector<16x128xf32>
    %10 = arith.maximumf %3, %9 : vector<16x128xf32>
    %11 = arith.mulf %3, %4 : vector<16x128xf32>
    %12 = arith.subf %10, %11 : vector<16x128xf32>
    %13 = math.log1p %8 : vector<16x128xf32>
    %14 = arith.addf %12, %13 : vector<16x128xf32>
    %cst_5 = arith.constant 1.000000e+00 : f32
    %15 = vector.broadcast %cst_5 : f32 to vector<16x128xf32>
    %16 = arith.addf %15, %8 : vector<16x128xf32>
    %17 = tpu.reciprocal %16 {approx = true} : vector<16x128xf32> -> vector<16x128xf32>
    %18 = arith.mulf %16, %17 : vector<16x128xf32>
    %cst_6 = arith.constant 2.000000e+00 : f32
    %19 = vector.broadcast %cst_6 : f32 to vector<16x128xf32>
    %20 = arith.subf %19, %18 : vector<16x128xf32>
    %21 = arith.mulf %17, %20 : vector<16x128xf32>
    %cst_7 = arith.constant 0.000000e+00 : f32
    %22 = vector.broadcast %cst_7 : f32 to vector<16x128xf32>
    %23 = arith.cmpf oge, %3, %22 : vector<16x128xf32>
    %24 = arith.mulf %8, %21 : vector<16x128xf32>
    %25 = arith.select %23, %21, %24 : vector<16x128xi1>, vector<16x128xf32>
    %cst_8 = arith.constant -5.000000e-01 : f32
    %26 = vector.broadcast %cst_8 : f32 to vector<16x128xf32>
    %27 = arith.mulf %4, %26 : vector<16x128xf32>
    %cst_9 = arith.constant 7.500000e-01 : f32
    %28 = vector.broadcast %cst_9 : f32 to vector<16x128xf32>
    %29 = arith.addf %28, %27 : vector<16x128xf32>
    %30 = arith.subf %4, %25 : vector<16x128xf32>
    %31 = arith.mulf %30, %30 : vector<16x128xf32>
    %32 = arith.mulf %14, %29 : vector<16x128xf32>
    %33 = arith.mulf %32, %31 : vector<16x128xf32>
    %c0_10 = arith.constant 0 : index
    %c0_11 = arith.constant 0 : index
    %34 = vector.load %arg5[%c0_10, %c0_11] : memref<8x128xf32, #tpu.memory_space<vmem>>, vector<8x128xf32>
    %35 = vector.shape_cast %33 : vector<16x128xf32> to vector<2x8x128xf32>
    %cst_12 = arith.constant dense<0.000000e+00> : vector<8x128xf32>
    %36 = vector.multi_reduction <add>, %35, %cst_12 [0] : vector<2x8x128xf32> to vector<8x128xf32>
    %37 = arith.addf %34, %36 : vector<8x128xf32>
    %c0_13 = arith.constant 0 : index
    %c0_14 = arith.constant 0 : index
    %38 = vector.load %arg5[%c0_13, %c0_14] : memref<8x128xf32, #tpu.memory_space<vmem>>, vector<8x128xf32>
    tpu.vector_store %arg5[%c0_13, %c0_14], %37 {strides = array<i32>} : memref<8x128xf32, #tpu.memory_space<vmem>>, vector<8x128xf32>,
    %c0_i32_15 = arith.constant 0 : i32
    %39 = arith.cmpi eq, %arg1, %c0_i32_15 : i32
    %40 = arith.extui %39 : i1 to i32
    %c0_i32_16 = arith.constant 0 : i32
    %41 = arith.cmpi ne, %40, %c0_i32_16 : i32
    scf.if %41 {
      %c0_17 = arith.constant 0 : index
      %c0_18 = arith.constant 0 : index
      %42 = vector.load %arg5[%c0_17, %c0_18] : memref<8x128xf32, #tpu.memory_space<vmem>>, vector<8x128xf32>
      %c0_19 = arith.constant 0 : index
      %c0_20 = arith.constant 0 : index
      %43 = vector.load %arg4[%c0_19, %c0_20] : memref<8x128xf32, #tpu.memory_space<vmem>>, vector<8x128xf32>
      tpu.vector_store %arg4[%c0_19, %c0_20], %42 {strides = array<i32>} : memref<8x128xf32, #tpu.memory_space<vmem>>, vector<8x128xf32>,
    } else {
    }
    return
  }
  func.func @transform_0(%arg0: i32, %arg1: i32) -> (i32, i32) {
    %c1_i32 = arith.constant 1 : i32
    %0 = arith.muli %arg0, %c1_i32 : i32
    %1 = arith.addi %0, %arg1 : i32
    %c0_i32 = arith.constant 0 : i32
    %c0_i32_0 = arith.constant 0 : i32
    return %1, %c0_i32 : i32, i32
  }
  func.func @transform_1(%arg0: i32, %arg1: i32) -> (i32, i32) {
    %c1_i32 = arith.constant 1 : i32
    %0 = arith.muli %arg0, %c1_i32 : i32
    %1 = arith.addi %0, %arg1 : i32
    %c0_i32 = arith.constant 0 : i32
    %c0_i32_0 = arith.constant 0 : i32
    return %1, %c0_i32 : i32, i32
  }
  func.func @transform_2(%arg0: i32, %arg1: i32) -> (i32, i32) {
    %c0_i32 = arith.constant 0 : i32
    %c0_i32_0 = arith.constant 0 : i32
    return %arg0, %c0_i32 : i32, i32
  }
}

</mosaic_0001>

<llo_original>
// kernel: tpu_custom_call.1
$region0: #{tpu_custom_call.1}
  #allocation0 [shape = 'u32[]', space=smem, size = 0x4, offset = 0x4, fixed_abs, tag = 'smem constant byte address 0x4 - core index']
  #allocation1 [shape = 'u32[72,128]{1,0:T(1,128)}', space=vmem, size = 0x9000, scoped, tag = 'internal scratch']
  #allocation2 [shape = 'f32[8,128]{1,0:T(8,128)}', space=vmem, size = 0x1000, scoped, tag = 'scratch operand']
  %s0 = inlined_call_operand.hbm [shape: f32[16,128], index: 0, kind: input, shape index: {}]
  %s1 = inlined_call_operand.hbm [shape: f32[16,128], index: 1, kind: input, shape index: {}]
  %s2 = inlined_call_operand.hbm [shape: f32[8,128], index: 2, kind: output, shape index: {}]
  %s3 = sld [smem:[#allocation0]]
  $region34: #{tpu_custom_call.1} parent=0
    _
  %s5 = ssub.s32 1, %s3
  %s6 = scalar_select 0, %s5, %s3
  $region1: #{tpu_custom_call.1} parent=0
    #allocation3 [shape = 'u8[8192]{0}', space=vmem, size = 0x2000, scoped, tag = 'input window, operand 0, single buffered']
    #allocation4 [shape = 's32[1]{0}', space=sflag, size = 0x4, scoped, tag = 'scoped memory for tpu_custom_call.1']
    #allocation5 [shape = 's32[1]{0}', space=sflag, size = 0x4, scoped, tag = 'scoped memory for tpu_custom_call.1']
    #allocation6 [shape = 'u8[8192]{0}', space=vmem, size = 0x2000, scoped, tag = 'input window, operand 1, single buffered']
    #allocation7 [shape = 's32[1]{0}', space=sflag, size = 0x4, scoped, tag = 'scoped memory for tpu_custom_call.1']
    #allocation8 [shape = 'u8[4096]{0}', space=vmem, size = 0x1000, scoped, tag = 'output window, operand 0, single buffered']
    %7 = vsyncpa [#allocation4], 0
    %8 = vsyncpa [#allocation7], 0
    %9 = vsyncpa [#allocation5], 0
    // Predicated region
    $region2: #{tpu_custom_call.1} parent=1 // pred_check
      _
    $region3: #{tpu_custom_call.1} parent=1 // pred_check_branch
      %11 = sbr.rel (0) target = $region5
    $region4: #{tpu_custom_call.1} parent=1 // pred_region
      %s12 = sadd.s32 0, 0
      %s13 = smul.u32 2, %s12
      %15 = vsyncadd [#allocation4], 0
      %s16 = smul.addr %s13, 8
      %s17 = scalar_lea.hbm %s0, %s16
      %s18 = sshll.u32 %s17, 4
      %s19 = int_to_ptr.hbm [resolvable:$true] %s18
      %s20 = sshll.u32 [#allocation3], 4
      %s21 = int_to_ptr.vmem [resolvable:$true] %s20
      %26 = dma.hbm_to_vmem [thread:$0]  %s19, 256, %s21, [#allocation4], 128, 128, 8
    $region5: #{tpu_custom_call.1} parent=1 // pred_fallthru
      _
    // Predicated region
    $region6: #{tpu_custom_call.1} parent=1 // pred_check
      _
    $region7: #{tpu_custom_call.1} parent=1 // pred_check_branch
      %28 = sbr.rel (0) target = $region9
    $region8: #{tpu_custom_call.1} parent=1 // pred_region
      %s29 = sadd.s32 0, 0
      %s30 = smul.u32 2, %s29
      %32 = vsyncadd [#allocation7], 0
      %s33 = smul.addr %s30, 8
      %s34 = scalar_lea.hbm %s1, %s33
      %s35 = sshll.u32 %s34, 4
      %s36 = int_to_ptr.hbm [resolvable:$true] %s35
      %s37 = sshll.u32 [#allocation6], 4
      %s38 = int_to_ptr.vmem [resolvable:$true] %s37
      %43 = dma.hbm_to_vmem [thread:$0]  %s36, 256, %s38, [#allocation7], 128, 128, 8
    $region9: #{tpu_custom_call.1} parent=1 // pred_fallthru
      _
    // Predicated region
    $region10: #{tpu_custom_call.1} parent=1 // pred_check
      _
    $region11: #{tpu_custom_call.1} parent=1 // pred_check_branch
      %45 = sbr.rel (0) target = $region13
    $region12: #{tpu_custom_call.1} parent=1 // pred_region
      %47 = dma.done [#allocation4], 256
    $region13: #{tpu_custom_call.1} parent=1 // pred_fallthru
      _
    // Predicated region
    $region14: #{tpu_custom_call.1} parent=1 // pred_check
      _
    $region15: #{tpu_custom_call.1} parent=1 // pred_check_branch
      %49 = sbr.rel (0) target = $region17
    $region16: #{tpu_custom_call.1} parent=1 // pred_region
      %51 = dma.done [#allocation7], 256
    $region17: #{tpu_custom_call.1} parent=1 // pred_fallthru
      _
    %s52 = sadd.s32 0, 0
    %s53 = smul.u32 2, %s52
    %s54 = sadd.s32 0, 0
    %s55 = smul.u32 2, %s54
    %p56 = scmp.eq.s32.totalorder 0, 0
    // Predicated region
    $region18: #{tpu_custom_call.1} parent=1 // pred_check
      %p57 = pneg %p56
    $region19: #{tpu_custom_call.1} parent=1 // pred_check_branch
      %59 = sbr.rel (%p57) target = $region21
    $region20: #{tpu_custom_call.1} parent=1 // pred_region
      %60 = vst [vmem:[#allocation2] sm:$0xff] 0.0
    $region21: #{tpu_custom_call.1} parent=1 // pred_fallthru
      _
    %v61 = vld [vmem:[#allocation3] sm:$0xff]
    %v62 = vld [vmem:[#allocation3 + $0x8] sm:$0xff]
    %v63 = vld [vmem:[#allocation6] sm:$0xff]
    %v64 = vld [vmem:[#allocation6 + $0x8] sm:$0xff]
    %v65 = vand.u32 2147483647, %v61
    %v66 = vand.u32 2147483647, %v62
    %v67 = vsub.f32 0.0, %v65
    %v68 = vsub.f32 0.0, %v66
    %v69 = vmul.f32 %v67, 1.442695
    %v70 = vpow.pop %v69
    %v71 = vmul.f32 %v68, 1.442695
    %v72 = vpow.pop %v71
    %v73 = vmax.f32 %v61, 0.0
    %v74 = vmax.f32 %v62, 0.0
    %v75 = vmul.f32 %v61, %v63
    %v76 = vmul.f32 %v62, %v64
    %v77 = vsub.f32 %v73, %v75
    %v78 = vsub.f32 %v74, %v76
    %v79 = vadd.f32 %v70, 1.0
    %v80 = vlog2.pop %v79
    %v81 = vmul.f32 %v80, 0.6931472
    %v82 = vmul.f32 -0.5, %v70
    %v83 = vadd.f32 %v82, 1.0
    %v84 = vmul.f32 %v83, %v70
    %v85 = vand.u32 2147483647, %v70
    %vm86 = vcmp.lt.f32.partialorder %v85, 0.0004427343
    %v87 = vsel %vm86, %v84, %v81
    %v88 = vadd.f32 %v72, 1.0
    %v89 = vlog2.pop %v88
    %v90 = vmul.f32 %v89, 0.6931472
    %v91 = vmul.f32 -0.5, %v72
    %v92 = vadd.f32 %v91, 1.0
    %v93 = vmul.f32 %v92, %v72
    %v94 = vand.u32 2147483647, %v72
    %vm95 = vcmp.lt.f32.partialorder %v94, 0.0004427343
    %v96 = vsel %vm95, %v93, %v90
    %v97 = vadd.f32 %v77, %v87
    %v98 = vadd.f32 %v78, %v96
    %v99 = vadd.f32 %v70, 1.0
    %v100 = vadd.f32 %v72, 1.0
    %v101 = vrcp.pop %v99
    %v102 = vrcp.pop %v100
    %v103 = vmul.f32 %v99, %v101
    %v104 = vmul.f32 %v100, %v102
    %v105 = vsub.f32 2.0, %v103
    %v106 = vsub.f32 2.0, %v104
    %v107 = vmul.f32 %v101, %v105
    %v108 = vmul.f32 %v102, %v106
    %vm109 = vcmp.ge.f32.partialorder %v61, 0.0
    %vm110 = vcmp.ge.f32.partialorder %v62, 0.0
    %v111 = vmul.f32 %v70, %v107
    %v112 = vmul.f32 %v72, %v108
    %v113 = vsel %vm109, %v107, %v111
    %v114 = vsel %vm110, %v108, %v112
    %v115 = vmul.f32 %v63, -0.5
    %v116 = vmul.f32 %v64, -0.5
    %v117 = vadd.f32 %v115, 0.75
    %v118 = vadd.f32 %v116, 0.75
    %v119 = vsub.f32 %v63, %v113
    %v120 = vsub.f32 %v64, %v114
    %v121 = vmul.f32 %v119, %v119
    %v122 = vmul.f32 %v120, %v120
    %v123 = vmul.f32 %v97, %v117
    %v124 = vmul.f32 %v98, %v118
    %v125 = vmul.f32 %v123, %v121
    %v126 = vmul.f32 %v124, %v122
    %v127 = vld [vmem:[#allocation2] sm:$0xff]
    %v128 = vadd.f32 %v125, %v126
    %v129 = vadd.f32 %v127, %v128
    %130 = vst [vmem:[#allocation2] sm:$0xff] %v129
    // Predicated region
    $region22: #{tpu_custom_call.1} parent=1 // pred_check
      %p131 = pneg %p56
    $region23: #{tpu_custom_call.1} parent=1 // pred_check_branch
      %133 = sbr.rel (%p131) target = $region25
    $region24: #{tpu_custom_call.1} parent=1 // pred_region
      %v134 = vld [vmem:[#allocation2] sm:$0xff]
      %135 = vst [vmem:[#allocation8] sm:$0xff] %v134
    $region25: #{tpu_custom_call.1} parent=1 // pred_fallthru
      _
    // Predicated region
    $region26: #{tpu_custom_call.1} parent=1 // pred_check
      _
    $region27: #{tpu_custom_call.1} parent=1 // pred_check_branch
      %137 = sbr.rel (0) target = $region29
    $region28: #{tpu_custom_call.1} parent=1 // pred_region
      %139 = vsyncadd [#allocation5], 0
      %s141 = sshll.u32 [#allocation8], 4
      %s142 = int_to_ptr.vmem [resolvable:$true] %s141
      %s143 = sshll.u32 %s2, 4
      %s144 = int_to_ptr.hbm [resolvable:$true] %s143
      %146 = dma.vmem_to_hbm [thread:$0]  %s142, 128, %s144, [#allocation5]
    $region29: #{tpu_custom_call.1} parent=1 // pred_fallthru
      _
    // Predicated region
    $region30: #{tpu_custom_call.1} parent=1 // pred_check
      _
    $region31: #{tpu_custom_call.1} parent=1 // pred_check_branch
      %148 = sbr.rel (0) target = $region33
    $region32: #{tpu_custom_call.1} parent=1 // pred_region
      %150 = dma.done [#allocation5], 128
    $region33: #{tpu_custom_call.1} parent=1 // pred_fallthru
      _
    %151 = vsyncpa [#allocation4], 1
    %152 = vsyncpa [#allocation7], 1
    %153 = vsyncpa [#allocation5], 1

</llo_original>
